<compile_context>
chip_gen: v7x
topology: tpu7x:2x2x1
jax: 0.10.0
libtpu: 0.0.40
codegen_flags: <defaults>
</compile_context>

<pallas_src>
import functools
import math

import jax
import jax.numpy as jnp
from jax.experimental import pallas as pl
from jax.experimental.pallas import tpu as pltpu


# ---------------------------------------------------------------------------
# Tiling helpers (pure Python, compile-time)
# ---------------------------------------------------------------------------
def _choose_row_tile(rows: int, cols: int, itemsize: int,
                     target_bytes: int) -> int:
    """Row tile for a (rows, cols) 2-D view.

    - Block bytes capped at ~target_bytes (never a whole-tensor fallback).
    - Tile is a multiple of 8 (sublane) unless rows itself is < 8, in which
      case the tile equals rows (block dim == full array dim is allowed).
    - Capped so the grid has >= 2 steps when rows allow it (v7x megacore).
    Ragged last blocks are fine: callers use pl.cdiv grids and the kernels
    are per-row / elementwise, so padded rows are harmless.
    """
    if rows < 8:
        return rows
    cap = max(8, (target_bytes // max(cols * itemsize, 1)) // 8 * 8)
    tr = min(cap, (rows // 8) * 8)
    tr = max(8, tr)
    # Ensure >= 2 grid steps so the parallel axis can shard across 2 TCs (v7x).
    if rows >= 16 and tr > rows // 2:
        tr = max(8, (rows // 2) // 8 * 8)
    return tr


def _choose_lane_dense_cols(total: int, cap: int = 32768) -> int:
    """Largest multiple-of-128 divisor of `total` (capped); 0 if none exists."""
    best = 0
    c = 128
    limit = min(total, cap)
    while c <= limit:
        if total % c == 0:
            best = c
        c += 128
    return best


# ---------------------------------------------------------------------------
# Kernel 1: LayerNormalization (reduction over the last dim)
# ---------------------------------------------------------------------------
def _layernorm_kernel(params_ref, x_ref, o_ref, *, eps: float):
    # params_ref: SMEM (2,)  -> [alpha, bias]
    # x_ref/o_ref: VMEM (tr, d)
    x = x_ref[...].astype(jnp.float32)
    d = x.shape[-1]

    # Single-pass statistics: sum and sum-of-squares (f32 accumulation).
    s = jnp.sum(x, axis=-1, keepdims=True)
    ss = jnp.sum(x * x, axis=-1, keepdims=True)
    mean = s * (1.0 / d)
    inv_nm1 = 1.0 / max(d - 1, 1)          # torch.std default: unbiased (N-1)
    var = jnp.maximum((ss - d * mean * mean) * inv_nm1, 0.0)
    std = jnp.sqrt(var)

    alpha = params_ref[0]
    bias = params_ref[1]
    # Per-row scale: one exact divide on a (tr, 1) vector, then the big
    # (tr, d) epilogue is a single fused mul-add per element.
    scale = alpha / (std + eps)
    o_ref[...] = ((x - mean) * scale + bias).astype(o_ref.dtype)


def layer_norm(x: jnp.ndarray, alpha: jnp.ndarray, bias: jnp.ndarray,
               *, eps: float = 1e-6) -> jnp.ndarray:
    """LayerNormalization over the last dim; x: (..., d_model)."""
    orig_shape = x.shape
    d = orig_shape[-1]
    n = math.prod(orig_shape[:-1])
    x2 = x.reshape(n, d)

    # alpha/bias are scalar (shape (1,)) parameters -> SMEM via scalar prefetch.
    params = jnp.concatenate([alpha.reshape(1), bias.reshape(1)]).astype(jnp.float32)

    # ~3 MiB blocks: (in + out) x 2 pipeline buffers = ~12 MiB < v5e's 16 MiB
    # scoped default; trivially inside v6e (32 MiB) and v7x (64 MiB physical).
    tr = _choose_row_tile(n, d, x.dtype.itemsize, target_bytes=3 << 20)
    grid = (pl.cdiv(n, tr),)

    nbytes = n * d * x.dtype.itemsize
    cost = pl.CostEstimate(flops=8 * n * d, transcendentals=n,
                           bytes_accessed=2 * nbytes)

    out = pl.pallas_call(
        functools.partial(_layernorm_kernel, eps=eps),
        out_shape=jax.ShapeDtypeStruct((n, d), x.dtype),
        grid_spec=pltpu.PrefetchScalarGridSpec(
            num_scalar_prefetch=1,
            grid=grid,
            in_specs=[pl.BlockSpec((tr, d), lambda i, params: (i, 0))],
            out_specs=pl.BlockSpec((tr, d), lambda i, params: (i, 0)),
        ),
        compiler_params=pltpu.CompilerParams(
            dimension_semantics=("parallel",),
        ),
        cost_estimate=cost,
    )(params, x2)
    return out.reshape(orig_shape)


# ---------------------------------------------------------------------------
# Kernel 2: residual add (eval-mode dropout == identity), lane-dense layout,
#           with the sublayer-output dtype cast fused in.
# ---------------------------------------------------------------------------
def _residual_add_kernel(x_ref, y_ref, o_ref):
    # y may be a wider dtype than x (e.g. f32 sublayer output, bf16 x);
    # cast inside the kernel so no standalone astype pass touches HBM.
    o_ref[...] = x_ref[...] + y_ref[...].astype(x_ref.dtype)


def residual_add(x: jnp.ndarray, y: jnp.ndarray) -> jnp.ndarray:
    assert x.shape == y.shape
    orig_shape = x.shape
    total = math.prod(orig_shape)

    # Lane-dense flatten: last dim a multiple of 128 so stores are unmasked.
    cols = _choose_lane_dense_cols(total)
    if cols == 0:
        rows, cols = math.prod(orig_shape[:-1]), orig_shape[-1]
    else:
        rows = total // cols

    x2 = x.reshape(rows, cols)
    y2 = y.reshape(rows, cols)

    # ~2 MiB blocks: 3 BlockSpecs (x, y, out) x 2 buffers = ~12 MiB, inside
    # v5e's 16 MiB scoped-VMEM default (previous 4 MiB budget overshot it).
    max_itemsize = max(x.dtype.itemsize, y.dtype.itemsize)
    tr = _choose_row_tile(rows, cols, max_itemsize, target_bytes=2 << 20)
    grid = (pl.cdiv(rows, tr),)

    nbytes = total * (2 * x.dtype.itemsize + y.dtype.itemsize)
    cost = pl.CostEstimate(flops=total, transcendentals=0,
                           bytes_accessed=nbytes)

    # NOTE: no input_output_aliases here -- the caller does not donate x, so
    # aliasing would force XLA to insert a defensive copy of x (net loss).
    out = pl.pallas_call(
        _residual_add_kernel,
        out_shape=jax.ShapeDtypeStruct((rows, cols), x.dtype),
        grid_spec=pltpu.PrefetchScalarGridSpec(
            num_scalar_prefetch=0,
            grid=grid,
            in_specs=[
                pl.BlockSpec((tr, cols), lambda i: (i, 0)),
                pl.BlockSpec((tr, cols), lambda i: (i, 0)),
            ],
            out_specs=pl.BlockSpec((tr, cols), lambda i: (i, 0)),
        ),
        compiler_params=pltpu.CompilerParams(
            dimension_semantics=("parallel",),
        ),
        cost_estimate=cost,
    )(x2, y2)
    return out.reshape(orig_shape)


# ---------------------------------------------------------------------------
# ResidualConnection forward
# ---------------------------------------------------------------------------
def residual_connection_forward(x, sublayer, *, alpha, bias,
                                eps: float = 1e-6, dropout_p: float = 0.0):
    """x + dropout(sublayer(LayerNorm(x))), eval-mode dropout (identity)."""
    normed = layer_norm(x, alpha, bias, eps=eps)
    sub_out = sublayer(normed)  # arbitrary external callable -> plain JAX glue
    # TODO(synk): apply train-mode inverted dropout here (in-kernel RNG).
    # dtype cast of sub_out is fused into the add kernel (no extra HBM pass).
    return residual_add(x, sub_out)


# ---------------------------------------------------------------------------
# Demo / correctness check
# ---------------------------------------------------------------------------
if __name__ == "__main__":
    batch, seq_len, d_model = 2, 8, 32
    eps = 1e-6

    key = jax.random.PRNGKey(0)
    kx, kw, kb = jax.random.split(key, 3)
    x = jax.random.normal(kx, (batch, seq_len, d_model), dtype=jnp.float32)

    # Module parameters (match PyTorch init: alpha=1, bias=0).
    alpha = jnp.ones((1,), jnp.float32)
    bias = jnp.zeros((1,), jnp.float32)

    # Deterministic example sublayer (the callable passed to forward):
    # a small dense projection over d_model, executed in plain JAX.
    w = jax.random.normal(kw, (d_model, d_model), jnp.float32) * 0.02
    b = jax.random.normal(kb, (d_model,), jnp.float32) * 0.02
    sublayer = lambda h: jnp.dot(h, w) + b

    # Plain-JAX reference.
    mean = x.mean(axis=-1, keepdims=True)
    std = jnp.std(x, axis=-1, keepdims=True, ddof=1)  # unbiased, like torch.std
    normed_ref = alpha[0] * (x - mean) / (std + eps) + bias[0]
    ref = x + sublayer(normed_ref)
    ref = jax.block_until_ready(ref)

    out = residual_connection_forward(x, sublayer, alpha=alpha, bias=bias, eps=eps)
    out = jax.block_until_ready(out)

    assert out.shape == (batch, seq_len, d_model)
    assert jnp.allclose(out, ref, atol=1e-5, rtol=1e-5), float(
        jnp.max(jnp.abs(out - ref)))

    print("KERNEL_OK")
</pallas_src>

<mosaic_0001>
module attributes {stable_mosaic.version = 11 : i64} {
  func.func @_layernorm_kernel(%arg0: i32, %arg1: memref<2xf32, #tpu.memory_space<smem>>, %arg2: memref<8x32xf32, #tpu.memory_space<vmem>>, %arg3: memref<8x32xf32, #tpu.memory_space<vmem>>) attributes {dimension_semantics = [#tpu.dimension_semantics<parallel>], iteration_bounds = array<i64: 2>, scalar_prefetch = 1 : i64, scratch_operands = 0 : i64, tpu.core_type = #tpu.core_type<tc>, window_params = [{transform_indices = @transform_0, window_bounds = array<i64: 8, 32>}, {transform_indices = @transform_1, window_bounds = array<i64: 8, 32>}]} {
    %c0 = arith.constant 0 : index
    %c0_0 = arith.constant 0 : index
    %0 = vector.load %arg2[%c0, %c0_0] : memref<8x32xf32, #tpu.memory_space<vmem>>, vector<8x32xf32>
    %cst = arith.constant dense<0.000000e+00> : vector<8xf32>
    %1 = vector.multi_reduction <add>, %0, %cst [1] : vector<8x32xf32> to vector<8xf32>
    %2 = vector.shape_cast %1 : vector<8xf32> to vector<8x1xf32>
    %3 = arith.mulf %0, %0 : vector<8x32xf32>
    %cst_1 = arith.constant dense<0.000000e+00> : vector<8xf32>
    %4 = vector.multi_reduction <add>, %3, %cst_1 [1] : vector<8x32xf32> to vector<8xf32>
    %5 = vector.shape_cast %4 : vector<8xf32> to vector<8x1xf32>
    %cst_2 = arith.constant 3.125000e-02 : f32
    %6 = vector.broadcast %cst_2 : f32 to vector<8x1xf32>
    %7 = arith.mulf %2, %6 : vector<8x1xf32>
    %cst_3 = arith.constant 3.200000e+01 : f32
    %8 = vector.broadcast %cst_3 : f32 to vector<8x1xf32>
    %9 = arith.mulf %8, %7 : vector<8x1xf32>
    %10 = arith.mulf %9, %7 : vector<8x1xf32>
    %11 = arith.subf %5, %10 : vector<8x1xf32>
    %cst_4 = arith.constant 0.0322580636 : f32
    %12 = vector.broadcast %cst_4 : f32 to vector<8x1xf32>
    %13 = arith.mulf %11, %12 : vector<8x1xf32>
    %cst_5 = arith.constant 0.000000e+00 : f32
    %14 = vector.broadcast %cst_5 : f32 to vector<8x1xf32>
    %15 = arith.maximumf %13, %14 : vector<8x1xf32>
    %16 = math.sqrt %15 : vector<8x1xf32>
    %c0_6 = arith.constant 0 : index
    %17 = memref.load %arg1[%c0_6] : memref<2xf32, #tpu.memory_space<smem>>
    %c1 = arith.constant 1 : index
    %18 = memref.load %arg1[%c1] : memref<2xf32, #tpu.memory_space<smem>>
    %cst_7 = arith.constant 9.99999997E-7 : f32
    %19 = vector.broadcast %cst_7 : f32 to vector<8x1xf32>
    %20 = arith.addf %16, %19 : vector<8x1xf32>
    %21 = vector.broadcast %17 : f32 to vector<8x1xf32>
    %22 = arith.divf %21, %20 : vector<8x1xf32>
    %23 = vector.broadcast %7 : vector<8x1xf32> to vector<8x32xf32>
    %24 = arith.subf %0, %23 : vector<8x32xf32>
    %25 = vector.broadcast %22 : vector<8x1xf32> to vector<8x32xf32>
    %26 = arith.mulf %24, %25 : vector<8x32xf32>
    %27 = vector.broadcast %18 : f32 to vector<8x32xf32>
    %28 = arith.addf %26, %27 : vector<8x32xf32>
    %c0_8 = arith.constant 0 : index
    %c0_9 = arith.constant 0 : index
    %29 = vector.load %arg3[%c0_8, %c0_9] : memref<8x32xf32, #tpu.memory_space<vmem>>, vector<8x32xf32>
    tpu.vector_store %arg3[%c0_8, %c0_9], %28 {strides = array<i32>} : memref<8x32xf32, #tpu.memory_space<vmem>>, vector<8x32xf32>,
    return
  }
  func.func @transform_0(%arg0: i32, %arg1: memref<2xf32, #tpu.memory_space<smem>>) -> (i32, i32) {
    %c0_i32 = arith.constant 0 : i32
    %c0_i32_0 = arith.constant 0 : i32
    return %arg0, %c0_i32 : i32, i32
  }
  func.func @transform_1(%arg0: i32, %arg1: memref<2xf32, #tpu.memory_space<smem>>) -> (i32, i32) {
    %c0_i32 = arith.constant 0 : i32
    %c0_i32_0 = arith.constant 0 : i32
    return %arg0, %c0_i32 : i32, i32
  }
}

</mosaic_0001>

<llo_original>
// kernel: tpu_custom_call.1
$region0: #{tpu_custom_call.1}
  #allocation0 [shape = 'u32[]', space=smem, size = 0x4, offset = 0x4, fixed_abs, tag = 'smem constant byte address 0x4 - core index']
  #allocation1 [shape = 'u32[144,128]{1,0:T(1,128)}', space=vmem, size = 0x12000, scoped, tag = 'internal scratch']
  #allocation2 [shape = 's32[1]{0}', space=sflag, size = 0x4, scoped, tag = 'scoped memory for tpu_custom_call.1']
  #allocation3 [shape = 'u8[512]{0}', space=smem, size = 0x200, scoped, tag = 'prefetched SMEM operand 0']
  %s0 = inlined_call_operand.hbm [shape: f32[2], index: 0, kind: input, shape index: {}]
  %s1 = inlined_call_operand.hbm [shape: f32[16,32], index: 1, kind: input, shape index: {}]
  %s2 = inlined_call_operand.hbm [shape: f32[16,32], index: 2, kind: output, shape index: {}]
  %s3 = sld [smem:[#allocation0]]
  $region41: #{tpu_custom_call.1} parent=0
    _
  %s5 = ssub.s32 1, %s3
  %s6 = scalar_select 0, %s5, %s3
  %8 = dma.hbm_to_smem %s0, 16, [#allocation3], [#allocation2]
  %9 = dma.done [#allocation2], 16
  %10 = sfence
  $region1: #{tpu_custom_call.1} parent=0
    #allocation4 [shape = 'u8[8192]{0}', space=vmem, size = 0x2000, scoped, tag = 'input window, operand 1']
    #allocation5 [shape = 's32[2]{0}', space=sflag, size = 0x8, scoped, tag = 'scoped memory for tpu_custom_call.1']
    #allocation6 [shape = 's32[2]{0}', space=sflag, size = 0x8, scoped, tag = 'scoped memory for tpu_custom_call.1']
    #allocation7 [shape = 'u8[8192]{0}', space=vmem, size = 0x2000, scoped, tag = 'output window, operand 0']
    %11 = vsyncpa [#allocation5], 0
    %s12 = scalar_lea.sflag [#allocation5], 1
    %13 = vsyncpa %s12, 0
    %14 = vsyncpa [#allocation6], 0
    %s15 = scalar_lea.sflag [#allocation6], 1
    %16 = vsyncpa %s15, 0
    loop: start=0, step=1, limit=4
    $region2: #{tpu_custom_call.1} parent=1 // loop_pre_header
      _
    $region3: #{tpu_custom_call.1} parent=1 // loop_header
      %s18 = sphi 0, %s22
      %p19 = scmp.ge.s32.totalorder %s18, 4
      %s28 = sphi 0, %s30
      %s31 = sphi 0, %s28
      %s32 = sphi 0, %s31
      %s48 = sphi 0, %s32
      %s54 = sphi 0, %s56
      %s57 = sphi 0, %s54
      %s58 = sphi 0, %s57
      %s74 = sphi 0, %s58
    $region4: #{tpu_custom_call.1} parent=1 // loop_header_branch
      %21 = sbr.rel (%p19) target = $region8
    $region5: #{tpu_custom_call.1} parent=1 // loop_body
      %s23 = ssub.s32 %s18, 1
      %s24 = ssub.s32 %s18, 2
      %s25 = sadd.s32 %s18, 1
      %s26 = ssub.s32 %s18, %s25
      %p27 = scmp.eq.s32.totalorder %s26, 0
      %s29 = sadd.s32 %s28, 1
      %s30 = scalar_select %p27, %s28, %s29
      %p33 = pneg %p27
      %p34 = scmp.eq.s32.totalorder %s18, 1
      %p35 = por %p33, %p34
      %p36 = scmp.ne.s32.totalorder %s28, %s31
      %p37 = scmp.eq.s32.totalorder %s18, 0
      %p38 = por %p36, %p37
      %p39 = scmp.ne.s32.totalorder %s28, %s31
      %p40 = scmp.eq.s32.totalorder %s23, 1
      %p41 = por %p39, %p40
      %p42 = scmp.ne.s32.totalorder %s31, %s32
      %p43 = scmp.eq.s32.totalorder %s23, 0
      %p44 = por %p42, %p43
      %p45 = scmp.ne.s32.totalorder %s31, %s32
      %p46 = scmp.eq.s32.totalorder %s24, 1
      %p47 = por %p45, %p46
      %p49 = scmp.ne.s32.totalorder %s32, %s48
      %p50 = scmp.eq.s32.totalorder %s24, 0
      %p51 = por %p49, %p50
      %s52 = ssub.s32 %s18, %s25
      %p53 = scmp.eq.s32.totalorder %s52, 0
      %s55 = sadd.s32 %s54, 1
      %s56 = scalar_select %p53, %s54, %s55
      %p59 = pneg %p53
      %p60 = scmp.eq.s32.totalorder %s18, 1
      %p61 = por %p59, %p60
      %p62 = scmp.ne.s32.totalorder %s54, %s57
      %p63 = scmp.eq.s32.totalorder %s18, 0
      %p64 = por %p62, %p63
      %p65 = scmp.ne.s32.totalorder %s54, %s57
      %p66 = scmp.eq.s32.totalorder %s23, 1
      %p67 = por %p65, %p66
      %p68 = scmp.ne.s32.totalorder %s57, %s58
      %p69 = scmp.eq.s32.totalorder %s23, 0
      %p70 = por %p68, %p69
      %p71 = scmp.ne.s32.totalorder %s57, %s58
      %p72 = scmp.eq.s32.totalorder %s24, 1
      %p73 = por %p71, %p72
      %p75 = scmp.ne.s32.totalorder %s58, %s74
      %p76 = scmp.eq.s32.totalorder %s24, 0
      %p77 = por %p75, %p76
      %p78 = scmp.le.s32.totalorder 1, %s18
      %p79 = scmp.lt.s32.totalorder %s18, 3
      %p80 = pnand %p78, %p79
      %p81 = pneg %p80
      // Predicated region
      $region9: #{tpu_custom_call.1} parent=5 // pred_check
        _
      $region10: #{tpu_custom_call.1} parent=5 // pred_check_branch
        %83 = sbr.rel (%p80) target = $region12
      $region11: #{tpu_custom_call.1} parent=5 // pred_region
        %s84 = ssub.s32 %s18, 1
      $region12: #{tpu_custom_call.1} parent=5 // pred_fallthru
        _
      %p85 = scmp.lt.s32.totalorder %s18, 2
      // Predicated region
      $region13: #{tpu_custom_call.1} parent=5 // pred_check
        %p86 = pneg %p85
      $region14: #{tpu_custom_call.1} parent=5 // pred_check_branch
        %88 = sbr.rel (%p86) target = $region16
      $region15: #{tpu_custom_call.1} parent=5 // pred_region
        // Predicated region
        $region17: #{tpu_custom_call.1} parent=15 // pred_check
          %p89 = pneg %p38
        $region18: #{tpu_custom_call.1} parent=15 // pred_check_branch
          %91 = sbr.rel (%p89) target = $region20
        $region19: #{tpu_custom_call.1} parent=15 // pred_region
          %s92 = sand.u32 %s28, 1
          %s93 = scalar_lea.sflag [#allocation5], %s92
          %s94 = sand.u32 %s28, 1
          %s95 = smul.addr %s94, 8
          %s96 = scalar_lea.vmem [#allocation4], %s95
          %s98 = ssub.s32 128, 128
          %99 = vsyncadd %s93, %s98
          %s100 = smul.addr %s18, 128
          %s101 = scalar_lea.hbm %s1, %s100
          %s103 = sshll.u32 %s96, 4
          %s104 = int_to_ptr.vmem [resolvable:$true] %s103
          %106 = dma.hbm_to_vmem [thread:$0]  %s101, 128, %s104, %s93
        $region20: #{tpu_custom_call.1} parent=15 // pred_fallthru
          _
      $region16: #{tpu_custom_call.1} parent=5 // pred_fallthru
        _
      %p107 = scmp.le.s32.totalorder 1, %s18
      %p108 = scmp.lt.s32.totalorder %s18, 3
      %p109 = pnand %p107, %p108
      %p110 = pneg %p109
      // Predicated region
      $region21: #{tpu_custom_call.1} parent=5 // pred_check
        _
      $region22: #{tpu_custom_call.1} parent=5 // pred_check_branch
        %112 = sbr.rel (%p109) target = $region24
      $region23: #{tpu_custom_call.1} parent=5 // pred_region
        %s113 = ssub.s32 %s18, 1
        %s114 = sand.u32 %s31, 1
        %s115 = scalar_lea.sflag [#allocation5], %s114
        %s116 = sand.u32 %s31, 1
        %s117 = smul.addr %s116, 8
        %s118 = scalar_lea.vmem [#allocation4], %s117
        // Predicated region
        $region25: #{tpu_custom_call.1} parent=23 // pred_check
          %p119 = pneg %p44
        $region26: #{tpu_custom_call.1} parent=23 // pred_check_branch
          %121 = sbr.rel (%p119) target = $region28
        $region27: #{tpu_custom_call.1} parent=23 // pred_region
          %122 = dma.done %s115, 128
        $region28: #{tpu_custom_call.1} parent=23 // pred_fallthru
          _
        %s123 = sand.u32 %s31, 1
        %s124 = scalar_lea.sflag [#allocation5], %s123
        %s125 = sand.u32 %s31, 1
        %s126 = smul.addr %s125, 8
        %s127 = scalar_lea.vmem [#allocation4], %s126
        %p128 = pneg %p44
        %p129 = pneg %p41
        %p130 = pneg %p70
        %p131 = pneg %p67
        %s132 = sand.u32 %s57, 1
        %s133 = scalar_lea.sflag [#allocation6], %s132
        %s134 = sand.u32 %s57, 1
        %s135 = smul.addr %s134, 8
        %s136 = scalar_lea.vmem [#allocation7], %s135
        %v137 = vld [vmem:[%s118] sm:$0xff]
        %vm138 = vcmask 261120
        %v139 = vsel %vm138, %v137, 0.0
        %140 = vadd.xlane.f32.xlu0 %v139
        %v141 = vpop.xlane.xlu0 %140
        %v142 = vmul.f32 %v137, %v137
        %v143 = vsel %vm138, %v142, 0.0
        %144 = vadd.xlane.f32.xlu0 %v143
        %v145 = vpop.xlane.xlu0 %144
        %v146 = vmul.f32 %v141, 0.03125
        %v147 = vmul.f32 %v146, 32.0
        %v148 = vmul.f32 %v147, %v146
        %v149 = vsub.f32 %v145, %v148
        %v150 = vmul.f32 %v149, 0.032258064
        %v151 = vmax.f32 %v150, 0.0
        %v152 = vrsqrt.pop %v151
        %v153 = vmul.f32 %v151, %v152
        %vm154 = vcmp.eq.f32.partialorder %v151, inf
        %v155 = vsel %vm154, %v151, %v153
        %vm156 = vcmp.eq.f32.partialorder %v151, 0.0
        %v157 = vand.u32 %v151, 2147483648
        %v158 = vsel %vm156, %v157, %v155
        %s159 = sld [smem:[#allocation3]]
        %s160 = sld [smem:[#allocation3 + $0x1]]
        %v161 = vadd.f32 %v158, 1e-06
        %v162 = vstv %s159
        %v163 = vrcp.pop %v161
        %v164 = vmul.f32 %v162, %v163
        %v165 = vsub.f32 %v137, %v146
        %v166 = vmul.f32 %v165, %v164
        %v167 = vstv %s160
        %v168 = vadd.f32 %v166, %v167
        %169 = vst.msk [vmem:[%s136] sm:$0xff] %vm138, %v168
        %s170 = sand.u32 %s57, 1
        %s171 = scalar_lea.sflag [#allocation6], %s170
        %s172 = sand.u32 %s57, 1
        %s173 = smul.addr %s172, 8
        %s174 = scalar_lea.vmem [#allocation7], %s173
        // Predicated region
        $region29: #{tpu_custom_call.1} parent=23 // pred_check
          %p175 = pneg %p67
        $region30: #{tpu_custom_call.1} parent=23 // pred_check_branch
          %177 = sbr.rel (%p175) target = $region32
        $region31: #{tpu_custom_call.1} parent=23 // pred_region
          %s179 = ssub.s32 128, 128
          %180 = vsyncadd %s171, %s179
          %s181 = smul.addr %s23, 128
          %s182 = scalar_lea.hbm %s2, %s181
          %s184 = sshll.u32 %s174, 4
          %s185 = int_to_ptr.vmem [resolvable:$true] %s184
          %187 = dma.vmem_to_hbm [thread:$0]  %s185, 128, %s182, %s171
        $region32: #{tpu_custom_call.1} parent=23 // pred_fallthru
          _
      $region24: #{tpu_custom_call.1} parent=5 // pred_fallthru
        _
      %p188 = scmp.le.s32.totalorder 2, %s18
      // Predicated region
      $region33: #{tpu_custom_call.1} parent=5 // pred_check
        %p189 = pneg %p188
      $region34: #{tpu_custom_call.1} parent=5 // pred_check_branch
        %191 = sbr.rel (%p189) target = $region36
      $region35: #{tpu_custom_call.1} parent=5 // pred_region
        %s192 = ssub.s32 %s18, 2
        // Predicated region
        $region37: #{tpu_custom_call.1} parent=35 // pred_check
          %p193 = pneg %p73
        $region38: #{tpu_custom_call.1} parent=35 // pred_check_branch
          %195 = sbr.rel (%p193) target = $region40
        $region39: #{tpu_custom_call.1} parent=35 // pred_region
          %s196 = sand.u32 %s58, 1
          %s197 = scalar_lea.sflag [#allocation6], %s196
          %s198 = sand.u32 %s58, 1
          %s199 = smul.addr %s198, 8
          %s200 = scalar_lea.vmem [#allocation7], %s199
          %201 = dma.done %s197, 128
        $region40: #{tpu_custom_call.1} parent=35 // pred_fallthru
          _
      $region36: #{tpu_custom_call.1} parent=5 // pred_fallthru
        _
    $region6: #{tpu_custom_call.1} parent=1 // loop_footer
      %s22 = sadd.s32 1, %s18
    $region7: #{tpu_custom_call.1} parent=1 // loop_footer_branch
      %17 = sbr.rel target = $region3
    $region8: #{tpu_custom_call.1} parent=1 // loop_exit
      _
    %202 = vsyncpa [#allocation5], 1
    %s203 = scalar_lea.sflag [#allocation5], 1
    %204 = vsyncpa %s203, 1
    %205 = vsyncpa [#allocation6], 1
    %s206 = scalar_lea.sflag [#allocation6], 1
    %207 = vsyncpa %s206, 1

</llo_original>
